<compile_context>
chip_gen: v5e
topology: v5e:2x2
jax: 0.10.0
libtpu: 0.0.40
codegen_flags: <defaults>
</compile_context>

<pallas_src>
import functools
import math

import jax
import jax.numpy as jnp
from jax.experimental import pallas as pl
from jax.experimental.pallas import tpu as pltpu

_LANE = 128
_SUB = 8


def _contrastive_block_kernel(dist_ref, label_ref, psum_ref, *, margin, total,
                              block_rows, chunk_rows, needs_mask):
    blk = pl.program_id(0)
    n_chunks = block_rows // chunk_rows

    if needs_mask:
        # Flat element offset within a (chunk_rows, 128) tile (row-major).
        flat_iota = (
            jax.lax.broadcasted_iota(jnp.int32, (chunk_rows, _LANE), 0) * _LANE
            + jax.lax.broadcasted_iota(jnp.int32, (chunk_rows, _LANE), 1)
        )
        block_base = blk * (block_rows * _LANE)

    def chunk_psum(r0):
        d = dist_ref[pl.ds(r0, chunk_rows), :].astype(jnp.float32)
        y = label_ref[pl.ds(r0, chunk_rows), :].astype(jnp.float32)
        hinge = jnp.maximum(jnp.float32(margin) - d, 0.0)
        # The 0.5 factor is folded into the wrapper-side scale (0.5 / total).
        contrib = y * (d * d) + (1.0 - y) * (hinge * hinge)
        if needs_mask:
            # Zero the contribution of out-of-range (ragged / padded) elements.
            limit = total - (block_base + r0 * _LANE)
            contrib = jnp.where(flat_iota < limit, contrib, 0.0)
        # (chunk_rows, 128) -> (chunk_rows//8, 8, 128); summing axis 0 is pure
        # elementwise vreg adds on the VPU (no XLU work, no VMEM intermediate).
        return jnp.sum(contrib.reshape(chunk_rows // _SUB, _SUB, _LANE), axis=0)

    if n_chunks == 1:
        psum_ref[...] = chunk_psum(0)
    else:
        def body(c, acc):
            r0 = pl.multiple_of(c * chunk_rows, chunk_rows)
            return acc + chunk_psum(r0)

        psum_ref[...] = jax.lax.fori_loop(
            0, n_chunks, body, jnp.zeros((_SUB, _LANE), jnp.float32),
            unroll=(n_chunks <= 8))


def _round_up(x, m):
    return -(-x // m) * m


def contrastive_loss(distance, label, margin=1.0, *, max_block_rows=8192):
    """Mean contrastive loss over all elements of `distance` / `label`."""
    assert distance.shape == label.shape
    total = math.prod(int(s) for s in distance.shape)
    assert total > 0

    d = distance.reshape(-1)
    y = label.reshape(-1)
    # Stream in the narrowest supported dtype; cast to f32 inside the kernel.
    if not (d.dtype == jnp.float32 or d.dtype == jnp.bfloat16):
        d = d.astype(jnp.float32)
    if not (y.dtype == jnp.float32 or y.dtype == jnp.bfloat16):
        y = y.astype(jnp.float32)
    is_bf16 = (d.dtype == jnp.bfloat16) or (y.dtype == jnp.bfloat16)
    align = 16 if is_bf16 else 8  # min sublane tile for the streamed dtypes

    rows_data = -(-total // _LANE)            # rows of 128 lanes covering the data
    flat_pad = rows_data * _LANE - total
    if flat_pad:
        # Rare slow path (<=127 elements): the flat length must be a multiple
        # of 128 to view as (rows, 128). Padded values are masked in-kernel.
        d = jnp.pad(d, (0, flat_pad))
        y = jnp.pad(y, (0, flat_pad))
    d2 = d.reshape(rows_data, _LANE)
    y2 = y.reshape(rows_data, _LANE)

    # Sanitize max_block_rows (in-kernel chunking assumes multiples of 512
    # above 512 rows).
    max_block_rows = int(max_block_rows)
    if max_block_rows >= 512:
        max_block_rows = (max_block_rows // 512) * 512
    else:
        max_block_rows = max(align, (max_block_rows // align) * align)

    # Prefer >= 2 blocks so dimension_semantics=("parallel",) can feed both
    # TensorCores on v7x, while keeping the double-buffered footprint small.
    target = _round_up(-(-rows_data // 2), align)
    block_rows = max(align, min(max_block_rows, target))
    if block_rows > 512:
        block_rows = min(max_block_rows, _round_up(block_rows, 512))
    num_blocks = -(-rows_data // block_rows)
    chunk_rows = block_rows if block_rows <= 512 else 512

    # Mask only needed when the grid coverage overshoots the element count.
    needs_mask = (num_blocks * block_rows * _LANE) != total

    # TODO(synk): margin is baked as a Python constant (matches the nn.Module
    # constructor); pass via scalar prefetch if a traced margin is ever needed.
    kernel = functools.partial(
        _contrastive_block_kernel, margin=float(margin), total=total,
        block_rows=block_rows, chunk_rows=chunk_rows, needs_mask=needs_mask)

    # 2 pipeline buffers x (both input blocks) + headroom for output buffers
    # and small chunk temporaries.
    in_bytes = block_rows * _LANE * (d2.dtype.itemsize + y2.dtype.itemsize)
    vmem_limit = int(2 * in_bytes + (8 << 20))

    partial = pl.pallas_call(
        kernel,
        out_shape=jax.ShapeDtypeStruct((num_blocks * _SUB, _LANE), jnp.float32),
        grid_spec=pltpu.PrefetchScalarGridSpec(
            num_scalar_prefetch=0,
            grid=(num_blocks,),
            in_specs=[
                pl.BlockSpec((block_rows, _LANE), lambda i: (i, 0)),
                pl.BlockSpec((block_rows, _LANE), lambda i: (i, 0)),
            ],
            out_specs=pl.BlockSpec((_SUB, _LANE), lambda i: (i, 0)),
        ),
        compiler_params=pltpu.CompilerParams(
            dimension_semantics=("parallel",),
            vmem_limit_bytes=vmem_limit,
        ),
    )(d2, y2)

    # Tiny final reduction + mean (0.5 folded out of the kernel) in JAX.
    return jnp.sum(partial) * jnp.float32(0.5 / total)


def _reference(distance, label, margin):
    d = distance.astype(jnp.float32)
    y = label.astype(jnp.float32)
    return jnp.mean(
        y * 0.5 * d ** 2
        + (1.0 - y) * 0.5 * jnp.maximum(margin - d, 0.0) ** 2
    )


if __name__ == "__main__":
    key = jax.random.PRNGKey(0)
    margin = 1.0

    # Test 1: tile-friendly shape (fast zero-pad, no-mask path).
    k1, k2, k3, k4 = jax.random.split(key, 4)
    B, N = 16, 128
    distance = jax.random.uniform(k1, (B, N), dtype=jnp.float32) * 2.0
    label = jax.random.bernoulli(k2, 0.5, (B, N)).astype(jnp.float32)
    loss = jax.block_until_ready(contrastive_loss(distance, label, margin=margin))
    ref = _reference(distance, label, margin)
    assert jnp.allclose(loss, ref, rtol=1e-5, atol=1e-6), (loss, ref)

    # Test 2: ragged shape (exercises the in-kernel tail mask).
    distance2 = jax.random.uniform(k3, (9, 130), dtype=jnp.float32) * 2.0
    label2 = jax.random.bernoulli(k4, 0.5, (9, 130)).astype(jnp.float32)
    loss2 = jax.block_until_ready(contrastive_loss(distance2, label2, margin=margin))
    ref2 = _reference(distance2, label2, margin)
    assert jnp.allclose(loss2, ref2, rtol=1e-5, atol=1e-6), (loss2, ref2)

    print("KERNEL_OK")
</pallas_src>

<mosaic_0001>
module attributes {stable_mosaic.version = 11 : i64} {
  func.func @_contrastive_block_kernel(%arg0: i32, %arg1: memref<8x128xf32, #tpu.memory_space<vmem>>, %arg2: memref<8x128xf32, #tpu.memory_space<vmem>>, %arg3: memref<8x128xf32, #tpu.memory_space<vmem>>) attributes {dimension_semantics = [#tpu.dimension_semantics<parallel>], iteration_bounds = array<i64: 2>, scalar_prefetch = 0 : i64, scratch_operands = 0 : i64, tpu.core_type = #tpu.core_type<tc>, window_params = [{transform_indices = @transform_0, window_bounds = array<i64: 8, 128>}, {transform_indices = @transform_1, window_bounds = array<i64: 8, 128>}, {transform_indices = @transform_2, window_bounds = array<i64: 8, 128>}]} {
    %c0 = arith.constant 0 : index
    %c0_0 = arith.constant 0 : index
    %0 = vector.load %arg1[%c0, %c0_0] : memref<8x128xf32, #tpu.memory_space<vmem>>, vector<8x128xf32>
    %c0_1 = arith.constant 0 : index
    %c0_2 = arith.constant 0 : index
    %1 = vector.load %arg2[%c0_1, %c0_2] : memref<8x128xf32, #tpu.memory_space<vmem>>, vector<8x128xf32>
    %cst = arith.constant 1.000000e+00 : f32
    %2 = vector.broadcast %cst : f32 to vector<8x128xf32>
    %3 = arith.subf %2, %0 : vector<8x128xf32>
    %cst_3 = arith.constant 0.000000e+00 : f32
    %4 = vector.broadcast %cst_3 : f32 to vector<8x128xf32>
    %5 = arith.maximumf %3, %4 : vector<8x128xf32>
    %6 = arith.mulf %0, %0 : vector<8x128xf32>
    %7 = arith.mulf %1, %6 : vector<8x128xf32>
    %cst_4 = arith.constant 1.000000e+00 : f32
    %8 = vector.broadcast %cst_4 : f32 to vector<8x128xf32>
    %9 = arith.subf %8, %1 : vector<8x128xf32>
    %10 = arith.mulf %5, %5 : vector<8x128xf32>
    %11 = arith.mulf %9, %10 : vector<8x128xf32>
    %12 = arith.addf %7, %11 : vector<8x128xf32>
    %13 = vector.shape_cast %12 : vector<8x128xf32> to vector<1x8x128xf32>
    %cst_5 = arith.constant dense<0.000000e+00> : vector<8x128xf32>
    %14 = vector.multi_reduction <add>, %13, %cst_5 [0] : vector<1x8x128xf32> to vector<8x128xf32>
    %c0_6 = arith.constant 0 : index
    %c0_7 = arith.constant 0 : index
    %15 = vector.load %arg3[%c0_6, %c0_7] : memref<8x128xf32, #tpu.memory_space<vmem>>, vector<8x128xf32>
    tpu.vector_store %arg3[%c0_6, %c0_7], %14 {strides = array<i32>} : memref<8x128xf32, #tpu.memory_space<vmem>>, vector<8x128xf32>,
    return
  }
  func.func @transform_0(%arg0: i32) -> (i32, i32) {
    %c0_i32 = arith.constant 0 : i32
    %c0_i32_0 = arith.constant 0 : i32
    return %arg0, %c0_i32 : i32, i32
  }
  func.func @transform_1(%arg0: i32) -> (i32, i32) {
    %c0_i32 = arith.constant 0 : i32
    %c0_i32_0 = arith.constant 0 : i32
    return %arg0, %c0_i32 : i32, i32
  }
  func.func @transform_2(%arg0: i32) -> (i32, i32) {
    %c0_i32 = arith.constant 0 : i32
    %c0_i32_0 = arith.constant 0 : i32
    return %arg0, %c0_i32 : i32, i32
  }
}

</mosaic_0001>

<llo_original>
// kernel: tpu_custom_call.1
$region0: #{tpu_custom_call.1}
  #allocation0 [shape = 'u32[]', space=smem, size = 0x4, offset = 0x4, fixed_abs, tag = 'smem constant byte address 0x4 - core index']
  #allocation1 [shape = 'u32[72,128]{1,0:T(1,128)}', space=vmem, size = 0x9000, scoped, tag = 'internal scratch']
  %s0 = inlined_call_operand.hbm [shape: f32[16,128], index: 0, kind: input, shape index: {}]
  %s1 = inlined_call_operand.hbm [shape: f32[16,128], index: 1, kind: input, shape index: {}]
  %s2 = inlined_call_operand.hbm [shape: f32[16,128], index: 2, kind: output, shape index: {}]
  %s3 = sld [smem:[#allocation0]]
  $region49: #{tpu_custom_call.1} parent=0
    _
  %s5 = ssub.s32 1, %s3
  %s6 = scalar_select 0, %s5, %s3
  $region1: #{tpu_custom_call.1} parent=0
    #allocation2 [shape = 'u8[8192]{0}', space=vmem, size = 0x2000, scoped, tag = 'input window, operand 0']
    #allocation3 [shape = 's32[2]{0}', space=sflag, size = 0x8, scoped, tag = 'scoped memory for tpu_custom_call.1']
    #allocation4 [shape = 's32[2]{0}', space=sflag, size = 0x8, scoped, tag = 'scoped memory for tpu_custom_call.1']
    #allocation5 [shape = 'u8[8192]{0}', space=vmem, size = 0x2000, scoped, tag = 'input window, operand 1']
    #allocation6 [shape = 's32[2]{0}', space=sflag, size = 0x8, scoped, tag = 'scoped memory for tpu_custom_call.1']
    #allocation7 [shape = 'u8[8192]{0}', space=vmem, size = 0x2000, scoped, tag = 'output window, operand 0']
    %7 = vsyncpa [#allocation3], 0
    %s8 = scalar_lea.sflag [#allocation3], 1
    %9 = vsyncpa %s8, 0
    %10 = vsyncpa [#allocation6], 0
    %s11 = scalar_lea.sflag [#allocation6], 1
    %12 = vsyncpa %s11, 0
    %13 = vsyncpa [#allocation4], 0
    %s14 = scalar_lea.sflag [#allocation4], 1
    %15 = vsyncpa %s14, 0
    loop: start=0, step=1, limit=4
    $region2: #{tpu_custom_call.1} parent=1 // loop_pre_header
      _
    $region3: #{tpu_custom_call.1} parent=1 // loop_header
      %s17 = sphi 0, %s21
      %p18 = scmp.ge.s32.totalorder %s17, 4
      %s27 = sphi 0, %s29
      %s30 = sphi 0, %s27
      %s31 = sphi 0, %s30
      %s47 = sphi 0, %s31
      %s53 = sphi 0, %s55
      %s56 = sphi 0, %s53
      %s57 = sphi 0, %s56
      %s73 = sphi 0, %s57
      %s79 = sphi 0, %s81
      %s82 = sphi 0, %s79
      %s83 = sphi 0, %s82
      %s99 = sphi 0, %s83
    $region4: #{tpu_custom_call.1} parent=1 // loop_header_branch
      %20 = sbr.rel (%p18) target = $region8
    $region5: #{tpu_custom_call.1} parent=1 // loop_body
      %s22 = ssub.s32 %s17, 1
      %s23 = ssub.s32 %s17, 2
      %s24 = sadd.s32 %s17, 1
      %s25 = ssub.s32 %s17, %s24
      %p26 = scmp.eq.s32.totalorder %s25, 0
      %s28 = sadd.s32 %s27, 1
      %s29 = scalar_select %p26, %s27, %s28
      %p32 = pneg %p26
      %p33 = scmp.eq.s32.totalorder %s17, 1
      %p34 = por %p32, %p33
      %p35 = scmp.ne.s32.totalorder %s27, %s30
      %p36 = scmp.eq.s32.totalorder %s17, 0
      %p37 = por %p35, %p36
      %p38 = scmp.ne.s32.totalorder %s27, %s30
      %p39 = scmp.eq.s32.totalorder %s22, 1
      %p40 = por %p38, %p39
      %p41 = scmp.ne.s32.totalorder %s30, %s31
      %p42 = scmp.eq.s32.totalorder %s22, 0
      %p43 = por %p41, %p42
      %p44 = scmp.ne.s32.totalorder %s30, %s31
      %p45 = scmp.eq.s32.totalorder %s23, 1
      %p46 = por %p44, %p45
      %p48 = scmp.ne.s32.totalorder %s31, %s47
      %p49 = scmp.eq.s32.totalorder %s23, 0
      %p50 = por %p48, %p49
      %s51 = ssub.s32 %s17, %s24
      %p52 = scmp.eq.s32.totalorder %s51, 0
      %s54 = sadd.s32 %s53, 1
      %s55 = scalar_select %p52, %s53, %s54
      %p58 = pneg %p52
      %p59 = scmp.eq.s32.totalorder %s17, 1
      %p60 = por %p58, %p59
      %p61 = scmp.ne.s32.totalorder %s53, %s56
      %p62 = scmp.eq.s32.totalorder %s17, 0
      %p63 = por %p61, %p62
      %p64 = scmp.ne.s32.totalorder %s53, %s56
      %p65 = scmp.eq.s32.totalorder %s22, 1
      %p66 = por %p64, %p65
      %p67 = scmp.ne.s32.totalorder %s56, %s57
      %p68 = scmp.eq.s32.totalorder %s22, 0
      %p69 = por %p67, %p68
      %p70 = scmp.ne.s32.totalorder %s56, %s57
      %p71 = scmp.eq.s32.totalorder %s23, 1
      %p72 = por %p70, %p71
      %p74 = scmp.ne.s32.totalorder %s57, %s73
      %p75 = scmp.eq.s32.totalorder %s23, 0
      %p76 = por %p74, %p75
      %s77 = ssub.s32 %s17, %s24
      %p78 = scmp.eq.s32.totalorder %s77, 0
      %s80 = sadd.s32 %s79, 1
      %s81 = scalar_select %p78, %s79, %s80
      %p84 = pneg %p78
      %p85 = scmp.eq.s32.totalorder %s17, 1
      %p86 = por %p84, %p85
      %p87 = scmp.ne.s32.totalorder %s79, %s82
      %p88 = scmp.eq.s32.totalorder %s17, 0
      %p89 = por %p87, %p88
      %p90 = scmp.ne.s32.totalorder %s79, %s82
      %p91 = scmp.eq.s32.totalorder %s22, 1
      %p92 = por %p90, %p91
      %p93 = scmp.ne.s32.totalorder %s82, %s83
      %p94 = scmp.eq.s32.totalorder %s22, 0
      %p95 = por %p93, %p94
      %p96 = scmp.ne.s32.totalorder %s82, %s83
      %p97 = scmp.eq.s32.totalorder %s23, 1
      %p98 = por %p96, %p97
      %p100 = scmp.ne.s32.totalorder %s83, %s99
      %p101 = scmp.eq.s32.totalorder %s23, 0
      %p102 = por %p100, %p101
      %p103 = scmp.le.s32.totalorder 1, %s17
      %p104 = scmp.lt.s32.totalorder %s17, 3
      %p105 = pnand %p103, %p104
      %p106 = pneg %p105
      // Predicated region
      $region9: #{tpu_custom_call.1} parent=5 // pred_check
        _
      $region10: #{tpu_custom_call.1} parent=5 // pred_check_branch
        %108 = sbr.rel (%p105) target = $region12
      $region11: #{tpu_custom_call.1} parent=5 // pred_region
        %s109 = ssub.s32 %s17, 1
      $region12: #{tpu_custom_call.1} parent=5 // pred_fallthru
        _
      %p110 = scmp.lt.s32.totalorder %s17, 2
      // Predicated region
      $region13: #{tpu_custom_call.1} parent=5 // pred_check
        %p111 = pneg %p110
      $region14: #{tpu_custom_call.1} parent=5 // pred_check_branch
        %113 = sbr.rel (%p111) target = $region16
      $region15: #{tpu_custom_call.1} parent=5 // pred_region
        // Predicated region
        $region17: #{tpu_custom_call.1} parent=15 // pred_check
          %p114 = pneg %p37
        $region18: #{tpu_custom_call.1} parent=15 // pred_check_branch
          %116 = sbr.rel (%p114) target = $region20
        $region19: #{tpu_custom_call.1} parent=15 // pred_region
          %s117 = sand.u32 %s27, 1
          %s118 = scalar_lea.sflag [#allocation3], %s117
          %s119 = sand.u32 %s27, 1
          %s120 = smul.addr %s119, 8
          %s121 = scalar_lea.vmem [#allocation2], %s120
          %123 = vsyncadd %s118, 0
          %s124 = smul.addr %s17, 8
          %s125 = scalar_lea.hbm %s0, %s124
          %s127 = sshll.u32 %s125, 4
          %s128 = int_to_ptr.hbm [resolvable:$true] %s127
          %s129 = sshll.u32 %s121, 4
          %s130 = int_to_ptr.vmem [resolvable:$true] %s129
          %132 = dma.hbm_to_vmem [thread:$0]  %s128, 128, %s130, %s118
        $region20: #{tpu_custom_call.1} parent=15 // pred_fallthru
          _
        // Predicated region
        $region21: #{tpu_custom_call.1} parent=15 // pred_check
          %p133 = pneg %p63
        $region22: #{tpu_custom_call.1} parent=15 // pred_check_branch
          %135 = sbr.rel (%p133) target = $region24
        $region23: #{tpu_custom_call.1} parent=15 // pred_region
          %s136 = sand.u32 %s53, 1
          %s137 = scalar_lea.sflag [#allocation6], %s136
          %s138 = sand.u32 %s53, 1
          %s139 = smul.addr %s138, 8
          %s140 = scalar_lea.vmem [#allocation5], %s139
          %142 = vsyncadd %s137, 0
          %s143 = smul.addr %s17, 8
          %s144 = scalar_lea.hbm %s1, %s143
          %s146 = sshll.u32 %s144, 4
          %s147 = int_to_ptr.hbm [resolvable:$true] %s146
          %s148 = sshll.u32 %s140, 4
          %s149 = int_to_ptr.vmem [resolvable:$true] %s148
          %151 = dma.hbm_to_vmem [thread:$0]  %s147, 128, %s149, %s137
        $region24: #{tpu_custom_call.1} parent=15 // pred_fallthru
          _
      $region16: #{tpu_custom_call.1} parent=5 // pred_fallthru
        _
      %p152 = scmp.le.s32.totalorder 1, %s17
      %p153 = scmp.lt.s32.totalorder %s17, 3
      %p154 = pnand %p152, %p153
      %p155 = pneg %p154
      // Predicated region
      $region25: #{tpu_custom_call.1} parent=5 // pred_check
        _
      $region26: #{tpu_custom_call.1} parent=5 // pred_check_branch
        %157 = sbr.rel (%p154) target = $region28
      $region27: #{tpu_custom_call.1} parent=5 // pred_region
        %s158 = ssub.s32 %s17, 1
        %s159 = sand.u32 %s30, 1
        %s160 = scalar_lea.sflag [#allocation3], %s159
        %s161 = sand.u32 %s30, 1
        %s162 = smul.addr %s161, 8
        %s163 = scalar_lea.vmem [#allocation2], %s162
        // Predicated region
        $region29: #{tpu_custom_call.1} parent=27 // pred_check
          %p164 = pneg %p43
        $region30: #{tpu_custom_call.1} parent=27 // pred_check_branch
          %166 = sbr.rel (%p164) target = $region32
        $region31: #{tpu_custom_call.1} parent=27 // pred_region
          %168 = dma.done %s160, 128
        $region32: #{tpu_custom_call.1} parent=27 // pred_fallthru
          _
        %s169 = sand.u32 %s56, 1
        %s170 = scalar_lea.sflag [#allocation6], %s169
        %s171 = sand.u32 %s56, 1
        %s172 = smul.addr %s171, 8
        %s173 = scalar_lea.vmem [#allocation5], %s172
        // Predicated region
        $region33: #{tpu_custom_call.1} parent=27 // pred_check
          %p174 = pneg %p69
        $region34: #{tpu_custom_call.1} parent=27 // pred_check_branch
          %176 = sbr.rel (%p174) target = $region36
        $region35: #{tpu_custom_call.1} parent=27 // pred_region
          %178 = dma.done %s170, 128
        $region36: #{tpu_custom_call.1} parent=27 // pred_fallthru
          _
        %s179 = sand.u32 %s30, 1
        %s180 = scalar_lea.sflag [#allocation3], %s179
        %s181 = sand.u32 %s30, 1
        %s182 = smul.addr %s181, 8
        %s183 = scalar_lea.vmem [#allocation2], %s182
        %p184 = pneg %p43
        %p185 = pneg %p40
        %s186 = sand.u32 %s56, 1
        %s187 = scalar_lea.sflag [#allocation6], %s186
        %s188 = sand.u32 %s56, 1
        %s189 = smul.addr %s188, 8
        %s190 = scalar_lea.vmem [#allocation5], %s189
        %p191 = pneg %p69
        %p192 = pneg %p66
        %p193 = pneg %p95
        %p194 = pneg %p92
        %s195 = sand.u32 %s82, 1
        %s196 = scalar_lea.sflag [#allocation4], %s195
        %s197 = sand.u32 %s82, 1
        %s198 = smul.addr %s197, 8
        %s199 = scalar_lea.vmem [#allocation7], %s198
        %v200 = vld [vmem:[%s163] sm:$0xff]
        %v201 = vld [vmem:[%s173] sm:$0xff]
        %v202 = vsub.f32 1.0, %v200
        %v203 = vmax.f32 %v202, 0.0
        %v204 = vmul.f32 %v200, %v200
        %v205 = vmul.f32 %v201, %v204
        %v206 = vsub.f32 1.0, %v201
        %v207 = vmul.f32 %v203, %v203
        %v208 = vmul.f32 %v206, %v207
        %v209 = vadd.f32 %v205, %v208
        %v210 = vadd.f32 %v209, 0.0
        %211 = vst [vmem:[%s199] sm:$0xff] %v210
        %s212 = sand.u32 %s82, 1
        %s213 = scalar_lea.sflag [#allocation4], %s212
        %s214 = sand.u32 %s82, 1
        %s215 = smul.addr %s214, 8
        %s216 = scalar_lea.vmem [#allocation7], %s215
        // Predicated region
        $region37: #{tpu_custom_call.1} parent=27 // pred_check
          %p217 = pneg %p92
        $region38: #{tpu_custom_call.1} parent=27 // pred_check_branch
          %219 = sbr.rel (%p217) target = $region40
        $region39: #{tpu_custom_call.1} parent=27 // pred_region
          %221 = vsyncadd %s213, 0
          %s222 = smul.addr %s22, 8
          %s223 = scalar_lea.hbm %s2, %s222
          %s225 = sshll.u32 %s216, 4
          %s226 = int_to_ptr.vmem [resolvable:$true] %s225
          %s227 = sshll.u32 %s223, 4
          %s228 = int_to_ptr.hbm [resolvable:$true] %s227
          %230 = dma.vmem_to_hbm [thread:$0]  %s226, 128, %s228, %s213
        $region40: #{tpu_custom_call.1} parent=27 // pred_fallthru
          _
      $region28: #{tpu_custom_call.1} parent=5 // pred_fallthru
        _
      %p231 = scmp.le.s32.totalorder 2, %s17
      // Predicated region
      $region41: #{tpu_custom_call.1} parent=5 // pred_check
        %p232 = pneg %p231
      $region42: #{tpu_custom_call.1} parent=5 // pred_check_branch
        %234 = sbr.rel (%p232) target = $region44
      $region43: #{tpu_custom_call.1} parent=5 // pred_region
        %s235 = ssub.s32 %s17, 2
        // Predicated region
        $region45: #{tpu_custom_call.1} parent=43 // pred_check
          %p236 = pneg %p98
        $region46: #{tpu_custom_call.1} parent=43 // pred_check_branch
          %238 = sbr.rel (%p236) target = $region48
        $region47: #{tpu_custom_call.1} parent=43 // pred_region
          %s239 = sand.u32 %s83, 1
          %s240 = scalar_lea.sflag [#allocation4], %s239
          %s241 = sand.u32 %s83, 1
          %s242 = smul.addr %s241, 8
          %s243 = scalar_lea.vmem [#allocation7], %s242
          %245 = dma.done %s240, 128
        $region48: #{tpu_custom_call.1} parent=43 // pred_fallthru
          _
      $region44: #{tpu_custom_call.1} parent=5 // pred_fallthru
        _
    $region6: #{tpu_custom_call.1} parent=1 // loop_footer
      %s21 = sadd.s32 1, %s17
    $region7: #{tpu_custom_call.1} parent=1 // loop_footer_branch
      %16 = sbr.rel target = $region3
    $region8: #{tpu_custom_call.1} parent=1 // loop_exit
      _
    %246 = vsyncpa [#allocation3], 1
    %s247 = scalar_lea.sflag [#allocation3], 1
    %248 = vsyncpa %s247, 1
    %249 = vsyncpa [#allocation6], 1
    %s250 = scalar_lea.sflag [#allocation6], 1
    %251 = vsyncpa %s250, 1
    %252 = vsyncpa [#allocation4], 1
    %s253 = scalar_lea.sflag [#allocation4], 1
    %254 = vsyncpa %s253, 1

</llo_original>
